<compile_context>
chip_gen: v7x
topology: tpu7x:2x2x1
jax: 0.10.0
libtpu: 0.0.40
codegen_flags: <defaults>
</compile_context>

<pallas_src>
import functools

import jax
import jax.numpy as jnp
from jax.experimental import pallas as pl
from jax.experimental.pallas import tpu as pltpu


def _edge_loss_kernel(c_ref, p_ref, w_ref, out_ref,
                      acc_ref, cprev_ref, pprev_ref, *, last_valid):
    """One (batch_block, lane_tile) grid cell.

    c_ref / p_ref : (Bb, T) interleaved (x, y) lanes of coords / pred
    w_ref         : (1, T)  per-lane weights (0 on x lanes, lbl_i + lbl_{i-1} on y lanes)
    out_ref       : (1, 1, 128) partial sum for this batch block (lane-broadcast scalar)
    acc_ref       : (Bb, T) f32 elementwise running accumulator
    cprev/pprev   : (Bb, 2) halo carry = previous lane tile's last two lanes
    """
    t = pl.program_id(1)
    nt = pl.num_programs(1)

    c = c_ref[...].astype(jnp.float32)
    p = p_ref[...].astype(jnp.float32)
    w = w_ref[...].astype(jnp.float32)

    # First lane tile of this batch block: zero the accumulator and seed the halo
    # with the tile's own first two lanes (their weight is 0, so only finiteness
    # matters -- this also prevents stale/NaN VMEM from leaking in).
    @pl.when(t == 0)
    def _():
        acc_ref[...] = jnp.zeros_like(acc_ref)
        cprev_ref[...] = c[:, 0:2]
        pprev_ref[...] = p[:, 0:2]

    cprev = cprev_ref[...]
    pprev = pprev_ref[...]

    # Shift by one point (2 interleaved lanes) with wrap-around.  Lanes 0,1 of the
    # rolled arrays hold this tile's LAST two lanes -- exactly the halo that must be
    # carried into the next tile.
    c_roll = pltpu.roll(c, shift=2, axis=1)
    p_roll = pltpu.roll(p, shift=2, axis=1)

    # e[:, 2i+1] = | |yc_i - yc_{i-1}| - |yp_i - yp_{i-1}| |   (x lanes killed by w)
    e_wrap = jnp.abs(jnp.abs(c - c_roll) - jnp.abs(p - p_roll))
    contrib = e_wrap * w              # wrong at lanes 0,1 (used wrap, not the carry)

    # Head (first point of the tile) terms, all on tiny (Bb, 2) slices.
    c0, p0 = c[:, 0:2], p[:, 0:2]
    cw, pw = c_roll[:, 0:2], p_roll[:, 0:2]   # wrap values == tile's last two lanes
    w0 = w[:, 0:2]
    e_head = jnp.abs(jnp.abs(c0 - cprev) - jnp.abs(p0 - pprev))   # correct (carry)
    e_head_wrap = jnp.abs(jnp.abs(c0 - cw) - jnp.abs(p0 - pw))    # == e_wrap[:, 0:2]

    @pl.when(t != nt - 1)
    def _():
        # Full interior tile: accumulate everything, then swap the two head lanes
        # from the wrap-around value to the carried value (exact cancellation since
        # e_head_wrap is bitwise-equal to e_wrap[:, 0:2]).
        acc_ref[...] += contrib
        acc_ref[:, 0:2] += (e_head - e_head_wrap) * w0

    @pl.when(t == nt - 1)
    def _():
        # Last (possibly ragged) lane tile: OOB lanes of the block may contain
        # NaN/Inf (and so may the wrap lanes), so keep only in-bounds lanes >= 2 via
        # a select and add the carried head term directly.  This is the only place
        # iota/compare/select run, so their VALU cost is amortized away.
        col = jax.lax.broadcasted_iota(jnp.int32, (1, c.shape[1]), 1)
        keep = jnp.logical_and(col >= 2, col < last_valid)
        acc_ref[...] += jnp.where(keep, contrib, 0.0)
        acc_ref[:, 0:2] += e_head * w0
        # Single cross-lane reduce per batch block; emit a lane-broadcast scalar.
        out_ref[...] = jnp.full(out_ref.shape, jnp.sum(acc_ref[...]), jnp.float32)

    # Carry this tile's last two lanes into the next tile.  (After the final tile of
    # a batch block this may hold garbage; it is re-seeded at t == 0 of the next one.)
    cprev_ref[...] = cw
    pprev_ref[...] = pw


def edge_loss(pred, coords, labels, *, lane_tile=None, batch_block=None,
              target_block_bytes=1 << 20, vmem_block_budget=20 << 20):
    """TPU Pallas implementation of edgeLoss.forward.

    pred, coords: (B, N, 2) float (f32 or bf16); labels: (N,) float.  Returns f32 scalar.
    (Like the PyTorch module, the result is NaN if sum(labels) == 0.)
    """
    B, N, C = pred.shape
    assert C == 2 and N >= 2
    assert coords.shape == (B, N, C) and labels.shape == (N,)
    N2 = 2 * N

    # Free, layout-preserving reshape: (B, N, 2) -> (B, 2N); y_i sits at lane 2i+1.
    c2 = coords.reshape(B, N2)
    p2 = pred.reshape(B, N2)

    # Per-point weights w_i = lbl_i + lbl_{i-1} (i >= 1), w_0 = 0; interleaved so x
    # lanes get 0.  O(N) 1-D work, negligible next to the (B, 2N) streams.
    lbl = labels.astype(jnp.float32)
    w_pts = jnp.concatenate([jnp.zeros((1,), jnp.float32), lbl[1:] + lbl[:-1]])
    w2 = jnp.stack([jnp.zeros_like(w_pts), w_pts], axis=-1).reshape(1, N2)

    def rup(x, m):
        return (x + m - 1) // m * m

    # ---- batch blocking: gives the "parallel" grid axis something to split across
    # v7x's two TensorCores and bounds VMEM for large B.  The block must divide B and
    # be either a multiple of 8 or B itself (TPU sublane rule).
    b_cap = 256
    if batch_block is not None:
        bb = batch_block
        assert B % bb == 0 and (bb == B or bb % 8 == 0)
    else:
        bb = B
        if B > b_cap:
            for cand in range(b_cap - b_cap % 8, 7, -8):
                if B % cand == 0:
                    bb = cand
                    break
    nb = B // bb

    # ---- lane tiling: large enough that each grid step streams >= ~target bytes of
    # coords+pred (per-step pipeline overhead ~0.35us), capped by a v7x-safe VMEM
    # budget (double-buffered inputs + f32 accumulator + headroom for elementwise
    # temporaries), and never larger than the (128-rounded) row itself.
    isz = jnp.dtype(coords.dtype).itemsize + jnp.dtype(pred.dtype).itemsize
    if lane_tile is not None:
        tile = lane_tile
        assert tile % 128 == 0
    else:
        t_full = rup(N2, 128)
        per_lane_stream = bb * isz                       # c+p bytes per lane column
        per_lane_vmem = 2 * per_lane_stream + 8 + 4 * bb + 48 * bb
        t_target = rup(max(target_block_bytes // per_lane_stream, 1), 128)
        t_cap = max((vmem_block_budget // per_lane_vmem) // 128 * 128, 256)
        tile = min(t_full, max(256, min(t_target, t_cap)))
    nt = (N2 + tile - 1) // tile
    last_valid = N2 - (nt - 1) * tile                    # valid lanes in last tile

    kernel = functools.partial(_edge_loss_kernel, last_valid=last_valid)

    partials = pl.pallas_call(
        kernel,
        out_shape=jax.ShapeDtypeStruct((nb, 1, 128), jnp.float32),
        grid_spec=pltpu.PrefetchScalarGridSpec(
            num_scalar_prefetch=0,
            grid=(nb, nt),
            in_specs=[
                pl.BlockSpec((bb, tile), lambda b, t: (b, t)),   # coords (B, 2N)
                pl.BlockSpec((bb, tile), lambda b, t: (b, t)),   # pred   (B, 2N)
                pl.BlockSpec((1, tile), lambda b, t: (0, t)),    # weights (1, 2N)
            ],
            out_specs=pl.BlockSpec((1, 1, 128), lambda b, t: (b, 0, 0)),
            scratch_shapes=[
                pltpu.VMEM((bb, tile), jnp.float32),   # elementwise accumulator
                pltpu.VMEM((bb, 2), jnp.float32),      # coords halo carry
                pltpu.VMEM((bb, 2), jnp.float32),      # pred halo carry
            ],
        ),
        compiler_params=pltpu.CompilerParams(
            dimension_semantics=("parallel", "arbitrary"),
            vmem_limit_bytes=32 * 1024 * 1024,
        ),
    )(c2, p2, w2)

    # Tiny final reduce + the single normalization: sum_b S_b / (sum(labels) * B).
    return jnp.sum(partials[:, 0, 0]) / (jnp.sum(lbl) * jnp.float32(B))


def edge_loss_ref(pred, coords, labels):
    """Pure-JAX reference mirroring the PyTorch loops (for verification)."""
    def get_dists(c):
        y = c[:, 1]
        top = jnp.abs(y - jnp.concatenate([y[:1], y[:-1]]))
        bot = jnp.abs(y - jnp.concatenate([y[1:], y[-1:]]))
        top = top.at[0].set(0.0)
        bot = bot.at[-1].set(0.0)
        return jnp.stack([top, bot], axis=-1)   # (N, 2)

    losses = []
    for b in range(pred.shape[0]):
        diff = jnp.abs(get_dists(coords[b]) - get_dists(pred[b]))
        masked = diff * labels[..., None]
        losses.append(jnp.sum(masked) / jnp.sum(labels))
    return jnp.sum(jnp.stack(losses)) / pred.shape[0]


if __name__ == "__main__":
    key = jax.random.PRNGKey(0)

    def run_case(B, N, k, dtype=jnp.float32, rtol=1e-4, **kw):
        k1, k2, k3 = jax.random.split(k, 3)
        pred = (jax.random.uniform(k1, (B, N, 2), dtype=jnp.float32) * 10.0).astype(dtype)
        coords = (jax.random.uniform(k2, (B, N, 2), dtype=jnp.float32) * 10.0).astype(dtype)
        labels = (jax.random.uniform(k3, (N,)) > 0.3).astype(jnp.float32)
        labels = labels.at[0].set(1.0)          # guarantee non-zero label sum
        out = edge_loss(pred, coords, labels, **kw)
        jax.block_until_ready(out)
        ref = edge_loss_ref(pred.astype(jnp.float32), coords.astype(jnp.float32), labels)
        assert jnp.allclose(out, ref, rtol=rtol, atol=rtol), (B, N, kw, out, ref)

    k1, k2, k3, k4 = jax.random.split(key, 4)
    # Default auto-tiling: single (ragged) lane tile, full-batch block.
    run_case(2, 1200, k1)
    # Forced small lane tiles: exercises the halo carry, interior tiles and the
    # ragged last tile (2*1200 = 2400 -> 10 tiles of 256, last_valid = 96).
    run_case(2, 1200, k2, lane_tile=256)
    # Batch blocking + "parallel" batch grid axis (nb = 2) + multiple lane tiles.
    run_case(16, 200, k3, lane_tile=128, batch_block=8)
    # bf16 ingestion (kernel upcasts to f32 in VMEM; halves HBM bytes).
    run_case(2, 192, k4, dtype=jnp.bfloat16, rtol=1e-3)

    print("KERNEL_OK")
</pallas_src>

<mosaic_0001>
module attributes {stable_mosaic.version = 11 : i64} {
  func.func @_edge_loss_kernel(%arg0: i32, %arg1: i32, %arg2: memref<2x2432xf32, #tpu.memory_space<vmem>>, %arg3: memref<2x2432xf32, #tpu.memory_space<vmem>>, %arg4: memref<1x2432xf32, #tpu.memory_space<vmem>>, %arg5: memref<1x1x128xf32, #tpu.memory_space<vmem>>, %arg6: memref<2x2432xf32, #tpu.memory_space<vmem>>, %arg7: memref<2x2xf32, #tpu.memory_space<vmem>>, %arg8: memref<2x2xf32, #tpu.memory_space<vmem>>) attributes {dimension_semantics = [#tpu.dimension_semantics<parallel>, #tpu.dimension_semantics<arbitrary>], iteration_bounds = array<i64: 1, 1>, scalar_prefetch = 0 : i64, scratch_operands = 3 : i64, tpu.core_type = #tpu.core_type<tc>, window_params = [{transform_indices = @transform_0, window_bounds = array<i64: 2, 2432>}, {transform_indices = @transform_1, window_bounds = array<i64: 2, 2432>}, {transform_indices = @transform_2, window_bounds = array<i64: 1, 2432>}, {transform_indices = @transform_3, window_bounds = array<i64: 1, 1, 128>}]} {
    %c0 = arith.constant 0 : index
    %c0_0 = arith.constant 0 : index
    %0 = vector.load %arg2[%c0, %c0_0] : memref<2x2432xf32, #tpu.memory_space<vmem>>, vector<2x2432xf32>
    %c0_1 = arith.constant 0 : index
    %c0_2 = arith.constant 0 : index
    %1 = vector.load %arg3[%c0_1, %c0_2] : memref<2x2432xf32, #tpu.memory_space<vmem>>, vector<2x2432xf32>
    %c0_3 = arith.constant 0 : index
    %c0_4 = arith.constant 0 : index
    %2 = vector.load %arg4[%c0_3, %c0_4] : memref<1x2432xf32, #tpu.memory_space<vmem>>, vector<1x2432xf32>
    %c0_i32 = arith.constant 0 : i32
    %3 = arith.cmpi eq, %arg1, %c0_i32 : i32
    %4 = arith.extui %3 : i1 to i32
    %c0_i32_5 = arith.constant 0 : i32
    %5 = arith.cmpi ne, %4, %c0_i32_5 : i32
    scf.if %5 {
      %cst = arith.constant 0.000000e+00 : f32
      %43 = vector.broadcast %cst : f32 to vector<2x2432xf32>
      %c0_19 = arith.constant 0 : index
      %c0_20 = arith.constant 0 : index
      %44 = vector.load %arg6[%c0_19, %c0_20] : memref<2x2432xf32, #tpu.memory_space<vmem>>, vector<2x2432xf32>
      tpu.vector_store %arg6[%c0_19, %c0_20], %43 {strides = array<i32>} : memref<2x2432xf32, #tpu.memory_space<vmem>>, vector<2x2432xf32>,
      %45 = vector.extract_strided_slice %0 {offsets = [0, 0], sizes = [2, 2], strides = [1, 1]} : vector<2x2432xf32> to vector<2x2xf32>
      %c0_21 = arith.constant 0 : index
      %c0_22 = arith.constant 0 : index
      %46 = vector.load %arg7[%c0_21, %c0_22] : memref<2x2xf32, #tpu.memory_space<vmem>>, vector<2x2xf32>
      tpu.vector_store %arg7[%c0_21, %c0_22], %45 {strides = array<i32>} : memref<2x2xf32, #tpu.memory_space<vmem>>, vector<2x2xf32>,
      %47 = vector.extract_strided_slice %1 {offsets = [0, 0], sizes = [2, 2], strides = [1, 1]} : vector<2x2432xf32> to vector<2x2xf32>
      %c0_23 = arith.constant 0 : index
      %c0_24 = arith.constant 0 : index
      %48 = vector.load %arg8[%c0_23, %c0_24] : memref<2x2xf32, #tpu.memory_space<vmem>>, vector<2x2xf32>
      tpu.vector_store %arg8[%c0_23, %c0_24], %47 {strides = array<i32>} : memref<2x2xf32, #tpu.memory_space<vmem>>, vector<2x2xf32>,
    } else {
    }
    %c0_6 = arith.constant 0 : index
    %c0_7 = arith.constant 0 : index
    %6 = vector.load %arg7[%c0_6, %c0_7] : memref<2x2xf32, #tpu.memory_space<vmem>>, vector<2x2xf32>
    %c0_8 = arith.constant 0 : index
    %c0_9 = arith.constant 0 : index
    %7 = vector.load %arg8[%c0_8, %c0_9] : memref<2x2xf32, #tpu.memory_space<vmem>>, vector<2x2xf32>
    %c2_i32 = arith.constant 2 : i32
    %8 = tpu.dynamic_rotate %0 by %c2_i32 dim 1 : vector<2x2432xf32>, i32 -> vector<2x2432xf32>
    %c2_i32_10 = arith.constant 2 : i32
    %9 = tpu.dynamic_rotate %1 by %c2_i32_10 dim 1 : vector<2x2432xf32>, i32 -> vector<2x2432xf32>
    %10 = arith.subf %0, %8 : vector<2x2432xf32>
    %11 = math.absf %10 : vector<2x2432xf32>
    %12 = arith.subf %1, %9 : vector<2x2432xf32>
    %13 = math.absf %12 : vector<2x2432xf32>
    %14 = arith.subf %11, %13 : vector<2x2432xf32>
    %15 = math.absf %14 : vector<2x2432xf32>
    %16 = vector.broadcast %2 : vector<1x2432xf32> to vector<2x2432xf32>
    %17 = arith.mulf %15, %16 : vector<2x2432xf32>
    %18 = vector.extract_strided_slice %0 {offsets = [0, 0], sizes = [2, 2], strides = [1, 1]} : vector<2x2432xf32> to vector<2x2xf32>
    %19 = vector.extract_strided_slice %1 {offsets = [0, 0], sizes = [2, 2], strides = [1, 1]} : vector<2x2432xf32> to vector<2x2xf32>
    %20 = vector.extract_strided_slice %8 {offsets = [0, 0], sizes = [2, 2], strides = [1, 1]} : vector<2x2432xf32> to vector<2x2xf32>
    %21 = vector.extract_strided_slice %9 {offsets = [0, 0], sizes = [2, 2], strides = [1, 1]} : vector<2x2432xf32> to vector<2x2xf32>
    %22 = vector.extract_strided_slice %2 {offsets = [0, 0], sizes = [1, 2], strides = [1, 1]} : vector<1x2432xf32> to vector<1x2xf32>
    %23 = arith.subf %18, %6 : vector<2x2xf32>
    %24 = math.absf %23 : vector<2x2xf32>
    %25 = arith.subf %19, %7 : vector<2x2xf32>
    %26 = math.absf %25 : vector<2x2xf32>
    %27 = arith.subf %24, %26 : vector<2x2xf32>
    %28 = math.absf %27 : vector<2x2xf32>
    %29 = arith.subf %18, %20 : vector<2x2xf32>
    %30 = math.absf %29 : vector<2x2xf32>
    %31 = arith.subf %19, %21 : vector<2x2xf32>
    %32 = math.absf %31 : vector<2x2xf32>
    %33 = arith.subf %30, %32 : vector<2x2xf32>
    %34 = math.absf %33 : vector<2x2xf32>
    %c0_i32_11 = arith.constant 0 : i32
    %35 = arith.cmpi ne, %arg1, %c0_i32_11 : i32
    %36 = arith.extui %35 : i1 to i32
    %c0_i32_12 = arith.constant 0 : i32
    %37 = arith.cmpi ne, %36, %c0_i32_12 : i32
    scf.if %37 {
      %c0_19 = arith.constant 0 : index
      %c0_20 = arith.constant 0 : index
      %43 = vector.load %arg6[%c0_19, %c0_20] : memref<2x2432xf32, #tpu.memory_space<vmem>>, vector<2x2432xf32>
      %44 = arith.addf %43, %17 : vector<2x2432xf32>
      %c0_21 = arith.constant 0 : index
      %c0_22 = arith.constant 0 : index
      %45 = vector.load %arg6[%c0_21, %c0_22] : memref<2x2432xf32, #tpu.memory_space<vmem>>, vector<2x2432xf32>
      tpu.vector_store %arg6[%c0_21, %c0_22], %44 {strides = array<i32>} : memref<2x2432xf32, #tpu.memory_space<vmem>>, vector<2x2432xf32>,
      %c0_23 = arith.constant 0 : index
      %c0_24 = arith.constant 0 : index
      %46 = vector.load %arg6[%c0_23, %c0_24] : memref<2x2432xf32, #tpu.memory_space<vmem>>, vector<2x2xf32>
      %47 = arith.subf %28, %34 : vector<2x2xf32>
      %48 = vector.broadcast %22 : vector<1x2xf32> to vector<2x2xf32>
      %49 = arith.mulf %47, %48 : vector<2x2xf32>
      %50 = arith.addf %46, %49 : vector<2x2xf32>
      %c0_25 = arith.constant 0 : index
      %c0_26 = arith.constant 0 : index
      %51 = vector.load %arg6[%c0_25, %c0_26] : memref<2x2432xf32, #tpu.memory_space<vmem>>, vector<2x2xf32>
      tpu.vector_store %arg6[%c0_25, %c0_26], %50 {strides = array<i32>} : memref<2x2432xf32, #tpu.memory_space<vmem>>, vector<2x2xf32>,
    } else {
    }
    %c0_i32_13 = arith.constant 0 : i32
    %38 = arith.cmpi eq, %arg1, %c0_i32_13 : i32
    %39 = arith.extui %38 : i1 to i32
    %c0_i32_14 = arith.constant 0 : i32
    %40 = arith.cmpi ne, %39, %c0_i32_14 : i32
    scf.if %40 {
      %43 = tpu.iota {dimensions = array<i32: 1>} : vector<1x2432xi32>
      %c2_i32_19 = arith.constant 2 : i32
      %44 = vector.broadcast %c2_i32_19 : i32 to vector<1x2432xi32>
      %45 = arith.cmpi sge, %43, %44 : vector<1x2432xi32>
      %c2400_i32 = arith.constant 2400 : i32
      %46 = vector.broadcast %c2400_i32 : i32 to vector<1x2432xi32>
      %47 = arith.cmpi slt, %43, %46 : vector<1x2432xi32>
      %48 = arith.andi %45, %47 : vector<1x2432xi1>
      %c0_20 = arith.constant 0 : index
      %c0_21 = arith.constant 0 : index
      %49 = vector.load %arg6[%c0_20, %c0_21] : memref<2x2432xf32, #tpu.memory_space<vmem>>, vector<2x2432xf32>
      %cst = arith.constant 0.000000e+00 : f32
      %50 = vector.shape_cast %48 : vector<1x2432xi1> to vector<1x2432xi1>
      %51 = vector.broadcast %50 : vector<1x2432xi1> to vector<2x2432xi1>
      %52 = vector.broadcast %cst : f32 to vector<2x2432xf32>
      %53 = arith.select %51, %17, %52 : vector<2x2432xi1>, vector<2x2432xf32>
      %54 = arith.addf %49, %53 : vector<2x2432xf32>
      %c0_22 = arith.constant 0 : index
      %c0_23 = arith.constant 0 : index
      %55 = vector.load %arg6[%c0_22, %c0_23] : memref<2x2432xf32, #tpu.memory_space<vmem>>, vector<2x2432xf32>
      tpu.vector_store %arg6[%c0_22, %c0_23], %54 {strides = array<i32>} : memref<2x2432xf32, #tpu.memory_space<vmem>>, vector<2x2432xf32>,
      %c0_24 = arith.constant 0 : index
      %c0_25 = arith.constant 0 : index
      %56 = vector.load %arg6[%c0_24, %c0_25] : memref<2x2432xf32, #tpu.memory_space<vmem>>, vector<2x2xf32>
      %57 = vector.broadcast %22 : vector<1x2xf32> to vector<2x2xf32>
      %58 = arith.mulf %28, %57 : vector<2x2xf32>
      %59 = arith.addf %56, %58 : vector<2x2xf32>
      %c0_26 = arith.constant 0 : index
      %c0_27 = arith.constant 0 : index
      %60 = vector.load %arg6[%c0_26, %c0_27] : memref<2x2432xf32, #tpu.memory_space<vmem>>, vector<2x2xf32>
      tpu.vector_store %arg6[%c0_26, %c0_27], %59 {strides = array<i32>} : memref<2x2432xf32, #tpu.memory_space<vmem>>, vector<2x2xf32>,
      %c0_28 = arith.constant 0 : index
      %c0_29 = arith.constant 0 : index
      %61 = vector.load %arg6[%c0_28, %c0_29] : memref<2x2432xf32, #tpu.memory_space<vmem>>, vector<2x2432xf32>
      %62 = vector.shape_cast %61 : vector<2x2432xf32> to vector<1x2x2432xf32>
      %cst_30 = arith.constant dense<0.000000e+00> : vector<1xf32>
      %63 = vector.multi_reduction <add>, %62, %cst_30 [1, 2] : vector<1x2x2432xf32> to vector<1xf32>
      %64 = vector.shape_cast %63 : vector<1xf32> to vector<1x1x1xf32>
      %65 = vector.extract %64[0, 0, 0] : f32 from vector<1x1x1xf32>
      %66 = vector.broadcast %65 : f32 to vector<1x1x128xf32>
      %c0_31 = arith.constant 0 : index
      %c0_32 = arith.constant 0 : index
      %c0_33 = arith.constant 0 : index
      %67 = vector.load %arg5[%c0_31, %c0_32, %c0_33] : memref<1x1x128xf32, #tpu.memory_space<vmem>>, vector<1x1x128xf32>
      tpu.vector_store %arg5[%c0_31, %c0_32, %c0_33], %66 {strides = array<i32>} : memref<1x1x128xf32, #tpu.memory_space<vmem>>, vector<1x1x128xf32>,
    } else {
    }
    %c0_15 = arith.constant 0 : index
    %c0_16 = arith.constant 0 : index
    %41 = vector.load %arg7[%c0_15, %c0_16] : memref<2x2xf32, #tpu.memory_space<vmem>>, vector<2x2xf32>
    tpu.vector_store %arg7[%c0_15, %c0_16], %20 {strides = array<i32>} : memref<2x2xf32, #tpu.memory_space<vmem>>, vector<2x2xf32>,
    %c0_17 = arith.constant 0 : index
    %c0_18 = arith.constant 0 : index
    %42 = vector.load %arg8[%c0_17, %c0_18] : memref<2x2xf32, #tpu.memory_space<vmem>>, vector<2x2xf32>
    tpu.vector_store %arg8[%c0_17, %c0_18], %21 {strides = array<i32>} : memref<2x2xf32, #tpu.memory_space<vmem>>, vector<2x2xf32>,
    return
  }
  func.func @transform_0(%arg0: i32, %arg1: i32) -> (i32, i32) {
    %c0_i32 = arith.constant 0 : i32
    return %arg0, %arg1 : i32, i32
  }
  func.func @transform_1(%arg0: i32, %arg1: i32) -> (i32, i32) {
    %c0_i32 = arith.constant 0 : i32
    return %arg0, %arg1 : i32, i32
  }
  func.func @transform_2(%arg0: i32, %arg1: i32) -> (i32, i32) {
    %c0_i32 = arith.constant 0 : i32
    %c0_i32_0 = arith.constant 0 : i32
    return %c0_i32, %arg1 : i32, i32
  }
  func.func @transform_3(%arg0: i32, %arg1: i32) -> (i32, i32, i32) {
    %c0_i32 = arith.constant 0 : i32
    %c0_i32_0 = arith.constant 0 : i32
    %c0_i32_1 = arith.constant 0 : i32
    return %arg0, %c0_i32, %c0_i32_0 : i32, i32, i32
  }
}

</mosaic_0001>

<llo_original>
// kernel: tpu_custom_call.1
$region0: #{tpu_custom_call.1}
  #allocation0 [shape = 'u32[]', space=smem, size = 0x4, offset = 0x4, fixed_abs, tag = 'smem constant byte address 0x4 - core index']
  #allocation1 [shape = 'u32[144,128]{1,0:T(1,128)}', space=vmem, size = 0x12000, scoped, tag = 'internal scratch']
  #allocation2 [shape = 'f32[2,2432]{1,0:T(2,128)}', space=vmem, size = 0x4c00, scoped, tag = 'scratch operand']
  #allocation3 [shape = 'f32[2,2]{1,0:T(2,128)}', space=vmem, size = 0x400, scoped, tag = 'scratch operand']
  #allocation4 [shape = 'f32[2,2]{1,0:T(2,128)}', space=vmem, size = 0x400, scoped, tag = 'scratch operand']
  %s0 = inlined_call_operand.hbm [shape: f32[2,2400], index: 0, kind: input, shape index: {}]
  %s1 = inlined_call_operand.hbm [shape: f32[2,2400], index: 1, kind: input, shape index: {}]
  %s2 = inlined_call_operand.hbm [shape: f32[1,2400], index: 2, kind: input, shape index: {}]
  %s3 = inlined_call_operand.hbm [shape: f32[1,1,128], index: 3, kind: output, shape index: {}]
  %s4 = sld [smem:[#allocation0]]
  $region46: #{tpu_custom_call.1} parent=0
    _
  %s6 = ssub.s32 1, %s4
  %s7 = scalar_select 0, %s6, %s4
  $region1: #{tpu_custom_call.1} parent=0
    #allocation5 [shape = 'u8[19456]{0}', space=vmem, size = 0x4c00, scoped, tag = 'input window, operand 0, single buffered']
    #allocation6 [shape = 's32[1]{0}', space=sflag, size = 0x4, scoped, tag = 'scoped memory for tpu_custom_call.1']
    #allocation7 [shape = 's32[1]{0}', space=sflag, size = 0x4, scoped, tag = 'scoped memory for tpu_custom_call.1']
    #allocation8 [shape = 'u8[19456]{0}', space=vmem, size = 0x4c00, scoped, tag = 'input window, operand 1, single buffered']
    #allocation9 [shape = 's32[1]{0}', space=sflag, size = 0x4, scoped, tag = 'scoped memory for tpu_custom_call.1']
    #allocation10 [shape = 'u8[9728]{0}', space=vmem, size = 0x2800, scoped, tag = 'input window, operand 2, single buffered']
    #allocation11 [shape = 'u8[512]{0}', space=vmem, size = 0x400, scoped, tag = 'output window, operand 0, single buffered']
    %8 = vsyncpa [#allocation6], 0
    %9 = vsyncpa [#allocation9], 0
    %10 = vsyncpa [#allocation7], 0
    // Predicated region
    $region2: #{tpu_custom_call.1} parent=1 // pred_check
      _
    $region3: #{tpu_custom_call.1} parent=1 // pred_check_branch
      %12 = sbr.rel (0) target = $region5
    $region4: #{tpu_custom_call.1} parent=1 // pred_region
      %s14 = ssub.s32 608, 608
      %15 = vsyncadd [#allocation6], %s14
      %s17 = sshll.u32 [#allocation5], 4
      %s18 = int_to_ptr.vmem [resolvable:$true] %s17
      %20 = dma.hbm_to_vmem [thread:$0]  %s0, 608, %s18, [#allocation6]
    $region5: #{tpu_custom_call.1} parent=1 // pred_fallthru
      _
    // Predicated region
    $region6: #{tpu_custom_call.1} parent=1 // pred_check
      _
    $region7: #{tpu_custom_call.1} parent=1 // pred_check_branch
      %22 = sbr.rel (0) target = $region9
    $region8: #{tpu_custom_call.1} parent=1 // pred_region
      %s24 = ssub.s32 608, 608
      %25 = vsyncadd [#allocation9], %s24
      %s27 = sshll.u32 [#allocation8], 4
      %s28 = int_to_ptr.vmem [resolvable:$true] %s27
      %30 = dma.hbm_to_vmem [thread:$0]  %s1, 608, %s28, [#allocation9]
    $region9: #{tpu_custom_call.1} parent=1 // pred_fallthru
      _
    // Predicated region
    $region10: #{tpu_custom_call.1} parent=1 // pred_check
      _
    $region11: #{tpu_custom_call.1} parent=1 // pred_check_branch
      %32 = sbr.rel (0) target = $region13
    $region12: #{tpu_custom_call.1} parent=1 // pred_region
      %s34 = ssub.s32 304, 304
      %35 = vsyncadd [#allocation9], %s34
      %s37 = sshll.u32 [#allocation10], 4
      %s38 = int_to_ptr.vmem [resolvable:$true] %s37
      %40 = dma.hbm_to_vmem [thread:$0]  %s2, 304, %s38, [#allocation9]
    $region13: #{tpu_custom_call.1} parent=1 // pred_fallthru
      _
    // Predicated region
    $region14: #{tpu_custom_call.1} parent=1 // pred_check
      _
    $region15: #{tpu_custom_call.1} parent=1 // pred_check_branch
      %42 = sbr.rel (0) target = $region17
    $region16: #{tpu_custom_call.1} parent=1 // pred_region
      %43 = dma.done [#allocation6], 608
    $region17: #{tpu_custom_call.1} parent=1 // pred_fallthru
      _
    // Predicated region
    $region18: #{tpu_custom_call.1} parent=1 // pred_check
      _
    $region19: #{tpu_custom_call.1} parent=1 // pred_check_branch
      %45 = sbr.rel (0) target = $region21
    $region20: #{tpu_custom_call.1} parent=1 // pred_region
      %46 = dma.done [#allocation9], 608
    $region21: #{tpu_custom_call.1} parent=1 // pred_fallthru
      _
    // Predicated region
    $region22: #{tpu_custom_call.1} parent=1 // pred_check
      _
    $region23: #{tpu_custom_call.1} parent=1 // pred_check_branch
      %48 = sbr.rel (0) target = $region25
    $region24: #{tpu_custom_call.1} parent=1 // pred_region
      %49 = dma.done [#allocation9], 304
    $region25: #{tpu_custom_call.1} parent=1 // pred_fallthru
      _
    %v50 = vld [vmem:[#allocation5] sm:$0xff]
    %v51 = vld [vmem:[#allocation5 + $0x8] sm:$0xff]
    %v52 = vld [vmem:[#allocation5 + $0x10] sm:$0xff]
    %v53 = vld [vmem:[#allocation5 + $0x18] sm:$0xff]
    %v54 = vld [vmem:[#allocation5 + $0x20] sm:$0x3f]
    %v55 = vld [vmem:[#allocation8] sm:$0xff]
    %v56 = vld [vmem:[#allocation8 + $0x8] sm:$0xff]
    %v57 = vld [vmem:[#allocation8 + $0x10] sm:$0xff]
    %v58 = vld [vmem:[#allocation8 + $0x18] sm:$0xff]
    %v59 = vld [vmem:[#allocation8 + $0x20] sm:$0x3f]
    %v60 = vld [vmem:[#allocation10] sm:$0xff]
    %v61 = vld [vmem:[#allocation10 + $0x8] sm:$0xff]
    %v62 = vld [vmem:[#allocation10 + $0x10] sm:$0x7]
    %p63 = scmp.eq.s32.totalorder 0, 0
    // Predicated region
    $region26: #{tpu_custom_call.1} parent=1 // pred_check
      %p64 = pneg %p63
    $region27: #{tpu_custom_call.1} parent=1 // pred_check_branch
      %66 = sbr.rel (%p64) target = $region29
    $region28: #{tpu_custom_call.1} parent=1 // pred_region
      %67 = vst [vmem:[#allocation2] sm:$0xff] 0.0
      %68 = vst [vmem:[#allocation2 + $0x8] sm:$0xff] 0.0
      %69 = vst [vmem:[#allocation2 + $0x10] sm:$0xff] 0.0
      %70 = vst [vmem:[#allocation2 + $0x18] sm:$0xff] 0.0
      %71 = vst [vmem:[#allocation2 + $0x20] sm:$0x3f] 0.0
      %vm72 = vcmask 9216
      %73 = vst.msk [vmem:[#allocation3] sm:$0x3] %vm72, %v50
      %74 = vst.msk [vmem:[#allocation4] sm:$0x3] %vm72, %v55
    $region29: #{tpu_custom_call.1} parent=1 // pred_fallthru
      _
    %v75 = vld [vmem:[#allocation3] sm:$0x3]
    %v76 = vld [vmem:[#allocation4] sm:$0x3]
    %v82 = vcombine.high %v50, %v50
    %v84 = vunpack.c.l.s4 1983009808
    %v85 = vunpack.c.0.s8 %v84
    %v86 = vlaneseq
    %v87 = vshrl.u32 %v86, 7
    %v88 = vsub.s32 %v85, %v87
    %v89 = vrot.slane %v50, %v88
    %v91 = vunpack.c.l.s4 1983009808
    %v92 = vunpack.c.0.s8 %v91
    %v93 = vlaneseq
    %v94 = vshrl.u32 %v93, 7
    %v95 = vsub.s32 %v92, %v94
    %v96 = vrot.slane %v82, %v95
    %v97 = vcombine.high %v89, %v89
    %v98 = vcombine.high %v96, %v96
    %v99 = vcombine.high %v51, %v51
    %v101 = vunpack.c.l.s4 1983009808
    %v102 = vunpack.c.0.s8 %v101
    %v103 = vlaneseq
    %v104 = vshrl.u32 %v103, 7
    %v105 = vsub.s32 %v102, %v104
    %v106 = vrot.slane %v51, %v105
    %v108 = vunpack.c.l.s4 1983009808
    %v109 = vunpack.c.0.s8 %v108
    %v110 = vlaneseq
    %v111 = vshrl.u32 %v110, 7
    %v112 = vsub.s32 %v109, %v111
    %v113 = vrot.slane %v99, %v112
    %v114 = vcombine.high %v106, %v106
    %v115 = vcombine.high %v113, %v113
    %v116 = vcombine.high %v52, %v52
    %v118 = vunpack.c.l.s4 1983009808
    %v119 = vunpack.c.0.s8 %v118
    %v120 = vlaneseq
    %v121 = vshrl.u32 %v120, 7
    %v122 = vsub.s32 %v119, %v121
    %v123 = vrot.slane %v52, %v122
    %v125 = vunpack.c.l.s4 1983009808
    %v126 = vunpack.c.0.s8 %v125
    %v127 = vlaneseq
    %v128 = vshrl.u32 %v127, 7
    %v129 = vsub.s32 %v126, %v128
    %v130 = vrot.slane %v116, %v129
    %v131 = vcombine.high %v123, %v123
    %v132 = vcombine.high %v130, %v130
    %v133 = vcombine.high %v53, %v53
    %v135 = vunpack.c.l.s4 1983009808
    %v136 = vunpack.c.0.s8 %v135
    %v137 = vlaneseq
    %v138 = vshrl.u32 %v137, 7
    %v139 = vsub.s32 %v136, %v138
    %v140 = vrot.slane %v53, %v139
    %v142 = vunpack.c.l.s4 1983009808
    %v143 = vunpack.c.0.s8 %v142
    %v144 = vlaneseq
    %v145 = vshrl.u32 %v144, 7
    %v146 = vsub.s32 %v143, %v145
    %v147 = vrot.slane %v133, %v146
    %v148 = vcombine.high %v140, %v140
    %v149 = vcombine.high %v147, %v147
    %v150 = vcombine.high %v54, %v54
    %v152 = vunpack.c.l.s4 1983009808
    %v153 = vunpack.c.0.s8 %v152
    %v154 = vlaneseq
    %v155 = vshrl.u32 %v154, 7
    %v156 = vsub.s32 %v153, %v155
    %v157 = vrot.slane %v54, %v156
    %v159 = vunpack.c.l.s4 1983009808
    %v160 = vunpack.c.0.s8 %v159
    %v161 = vlaneseq
    %v162 = vshrl.u32 %v161, 7
    %v163 = vsub.s32 %v160, %v162
    %v164 = vrot.slane %v150, %v163
    %v165 = vcombine.high %v157, %v157
    %185 = vrot.lane.b32.xlu0 %v89, 2
    %v186 = vpop.permute.xlu0 %185
    %187 = vrot.lane.b32.xlu0 %v97, 2
    %v188 = vpop.permute.xlu0 %187
    %189 = vrot.lane.b32.xlu0 %v96, 2
    %v190 = vpop.permute.xlu0 %189
    %191 = vrot.lane.b32.xlu0 %v98, 2
    %v192 = vpop.permute.xlu0 %191
    %193 = vrot.lane.b32.xlu0 %v106, 2
    %v194 = vpop.permute.xlu0 %193
    %195 = vrot.lane.b32.xlu0 %v114, 2
    %v196 = vpop.permute.xlu0 %195
    %197 = vrot.lane.b32.xlu0 %v113, 2
    %v198 = vpop.permute.xlu0 %197
    %199 = vrot.lane.b32.xlu0 %v115, 2
    %v200 = vpop.permute.xlu0 %199
    %201 = vrot.lane.b32.xlu0 %v123, 2
    %v202 = vpop.permute.xlu0 %201
    %203 = vrot.lane.b32.xlu0 %v131, 2
    %v204 = vpop.permute.xlu0 %203
    %205 = vrot.lane.b32.xlu0 %v130, 2
    %v206 = vpop.permute.xlu0 %205
    %207 = vrot.lane.b32.xlu0 %v132, 2
    %v208 = vpop.permute.xlu0 %207
    %209 = vrot.lane.b32.xlu0 %v140, 2
    %v210 = vpop.permute.xlu0 %209
    %211 = vrot.lane.b32.xlu0 %v148, 2
    %v212 = vpop.permute.xlu0 %211
    %213 = vrot.lane.b32.xlu0 %v147, 2
    %v214 = vpop.permute.xlu0 %213
    %215 = vrot.lane.b32.xlu0 %v149, 2
    %v216 = vpop.permute.xlu0 %215
    %217 = vrot.lane.b32.xlu0 %v157, 2
    %v218 = vpop.permute.xlu0 %217
    %219 = vrot.lane.b32.xlu0 %v165, 2
    %v220 = vpop.permute.xlu0 %219
    %221 = vrot.lane.b32.xlu0 %v164, 2
    %v222 = vpop.permute.xlu0 %221
    %v223 = vlaneseq
    %v224 = vand.u32 %v223, 127
    %vm225 = vcmp.lt.s32.totalorder %v224, 2
    %v226 = vsel %vm225, %v220, %v222
    %v227 = vsel %vm225, %v218, %v220
    %v228 = vsel %vm225, %v216, %v218
    %v229 = vsel %vm225, %v214, %v216
    %v230 = vsel %vm225, %v212, %v214
    %v231 = vsel %vm225, %v210, %v212
    %v232 = vsel %vm225, %v208, %v210
    %v233 = vsel %vm225, %v206, %v208
    %v234 = vsel %vm225, %v204, %v206
    %v235 = vsel %vm225, %v202, %v204
    %v236 = vsel %vm225, %v200, %v202
    %v237 = vsel %vm225, %v198, %v200
    %v238 = vsel %vm225, %v196, %v198
    %v239 = vsel %vm225, %v194, %v196
    %v240 = vsel %vm225, %v192, %v194
    %v241 = vsel %vm225, %v190, %v192
    %v242 = vsel %vm225, %v188, %v190
    %v243 = vsel %vm225, %v186, %v188
    %v244 = vsel %vm225, %v222, %v186
    %v250 = vcombine.high %v55, %v55
    %v252 = vunpack.c.l.s4 1983009808
    %v253 = vunpack.c.0.s8 %v252
    %v254 = vlaneseq
    %v255 = vshrl.u32 %v254, 7
    %v256 = vsub.s32 %v253, %v255
    %v257 = vrot.slane %v55, %v256
    %v259 = vunpack.c.l.s4 1983009808
    %v260 = vunpack.c.0.s8 %v259
    %v261 = vlaneseq
    %v262 = vshrl.u32 %v261, 7
    %v263 = vsub.s32 %v260, %v262
    %v264 = vrot.slane %v250, %v263
    %v265 = vcombine.high %v257, %v257
    %v266 = vcombine.high %v264, %v264
    %v267 = vcombine.high %v56, %v56
    %v269 = vunpack.c.l.s4 1983009808
    %v270 = vunpack.c.0.s8 %v269
    %v271 = vlaneseq
    %v272 = vshrl.u32 %v271, 7
    %v273 = vsub.s32 %v270, %v272
    %v274 = vrot.slane %v56, %v273
    %v276 = vunpack.c.l.s4 1983009808
    %v277 = vunpack.c.0.s8 %v276
    %v278 = vlaneseq
    %v279 = vshrl.u32 %v278, 7
    %v280 = vsub.s32 %v277, %v279
    %v281 = vrot.slane %v267, %v280
    %v282 = vcombine.high %v274, %v274
    %v283 = vcombine.high %v281, %v281
    %v284 = vcombine.high %v57, %v57
    %v286 = vunpack.c.l.s4 1983009808
    %v287 = vunpack.c.0.s8 %v286
    %v288 = vlaneseq
    %v289 = vshrl.u32 %v288, 7
    %v290 = vsub.s32 %v287, %v289
    %v291 = vrot.slane %v57, %v290
    %v293 = vunpack.c.l.s4 1983009808
    %v294 = vunpack.c.0.s8 %v293
    %v295 = vlaneseq
    %v296 = vshrl.u32 %v295, 7
    %v297 = vsub.s32 %v294, %v296
    %v298 = vrot.slane %v284, %v297
    %v299 = vcombine.high %v291, %v291
    %v300 = vcombine.high %v298, %v298
    %v301 = vcombine.high %v58, %v58
    %v303 = vunpack.c.l.s4 1983009808
    %v304 = vunpack.c.0.s8 %v303
    %v305 = vlaneseq
    %v306 = vshrl.u32 %v305, 7
    %v307 = vsub.s32 %v304, %v306
    %v308 = vrot.slane %v58, %v307
    %v310 = vunpack.c.l.s4 1983009808
    %v311 = vunpack.c.0.s8 %v310
    %v312 = vlaneseq
    %v313 = vshrl.u32 %v312, 7
    %v314 = vsub.s32 %v311, %v313
    %v315 = vrot.slane %v301, %v314
    %v316 = vcombine.high %v308, %v308
    %v317 = vcombine.high %v315, %v315
    %v318 = vcombine.high %v59, %v59
    %v320 = vunpack.c.l.s4 1983009808
    %v321 = vunpack.c.0.s8 %v320
    %v322 = vlaneseq
    %v323 = vshrl.u32 %v322, 7
    %v324 = vsub.s32 %v321, %v323
    %v325 = vrot.slane %v59, %v324
    %v327 = vunpack.c.l.s4 1983009808
    %v328 = vunpack.c.0.s8 %v327
    %v329 = vlaneseq
    %v330 = vshrl.u32 %v329, 7
    %v331 = vsub.s32 %v328, %v330
    %v332 = vrot.slane %v318, %v331
    %v333 = vcombine.high %v325, %v325
    %353 = vrot.lane.b32.xlu0 %v257, 2
    %v354 = vpop.permute.xlu0 %353
    %355 = vrot.lane.b32.xlu0 %v265, 2
    %v356 = vpop.permute.xlu0 %355
    %357 = vrot.lane.b32.xlu0 %v264, 2
    %v358 = vpop.permute.xlu0 %357
    %359 = vrot.lane.b32.xlu0 %v266, 2
    %v360 = vpop.permute.xlu0 %359
    %361 = vrot.lane.b32.xlu0 %v274, 2
    %v362 = vpop.permute.xlu0 %361
    %363 = vrot.lane.b32.xlu0 %v282, 2
    %v364 = vpop.permute.xlu0 %363
    %365 = vrot.lane.b32.xlu0 %v281, 2
    %v366 = vpop.permute.xlu0 %365
    %367 = vrot.lane.b32.xlu0 %v283, 2
    %v368 = vpop.permute.xlu0 %367
    %369 = vrot.lane.b32.xlu0 %v291, 2
    %v370 = vpop.permute.xlu0 %369
    %371 = vrot.lane.b32.xlu0 %v299, 2
    %v372 = vpop.permute.xlu0 %371
    %373 = vrot.lane.b32.xlu0 %v298, 2
    %v374 = vpop.permute.xlu0 %373
    %375 = vrot.lane.b32.xlu0 %v300, 2
    %v376 = vpop.permute.xlu0 %375
    %377 = vrot.lane.b32.xlu0 %v308, 2
    %v378 = vpop.permute.xlu0 %377
    %379 = vrot.lane.b32.xlu0 %v316, 2
    %v380 = vpop.permute.xlu0 %379
    %381 = vrot.lane.b32.xlu0 %v315, 2
    %v382 = vpop.permute.xlu0 %381
    %383 = vrot.lane.b32.xlu0 %v317, 2
    %v384 = vpop.permute.xlu0 %383
    %385 = vrot.lane.b32.xlu0 %v325, 2
    %v386 = vpop.permute.xlu0 %385
    %387 = vrot.lane.b32.xlu0 %v333, 2
    %v388 = vpop.permute.xlu0 %387
    %389 = vrot.lane.b32.xlu0 %v332, 2
    %v390 = vpop.permute.xlu0 %389
    %v391 = vsel %vm225, %v388, %v390
    %v392 = vsel %vm225, %v386, %v388
    %v393 = vsel %vm225, %v384, %v386
    %v394 = vsel %vm225, %v382, %v384
    %v395 = vsel %vm225, %v380, %v382
    %v396 = vsel %vm225, %v378, %v380
    %v397 = vsel %vm225, %v376, %v378
    %v398 = vsel %vm225, %v374, %v376
    %v399 = vsel %vm225, %v372, %v374
    %v400 = vsel %vm225, %v370, %v372
    %v401 = vsel %vm225, %v368, %v370
    %v402 = vsel %vm225, %v366, %v368
    %v403 = vsel %vm225, %v364, %v366
    %v404 = vsel %vm225, %v362, %v364
    %v405 = vsel %vm225, %v360, %v362
    %v406 = vsel %vm225, %v358, %v360
    %v407 = vsel %vm225, %v356, %v358
    %v408 = vsel %vm225, %v354, %v356
    %v409 = vsel %vm225, %v390, %v354
    %v429 = vcombine.low %v244, %v243
    %v430 = vcombine.low %v242, %v241
    %v432 = vunpack.c.l.s4 1983009808
    %v433 = vunpack.c.0.s8 %v432
    %v434 = vlaneseq
    %v435 = vshrl.u32 %v434, 7
    %v436 = vsub.s32 %v433, %v435
    %v437 = vrot.slane %v429, %v436
    %v439 = vunpack.c.l.s4 1983009808
    %v440 = vunpack.c.0.s8 %v439
    %v441 = vlaneseq
    %v442 = vshrl.u32 %v441, 7
    %v443 = vsub.s32 %v440, %v442
    %v444 = vrot.slane %v430, %v443
    %v445 = vcombine.low %v437, %v444
    %v446 = vcombine.low %v240, %v239
    %v447 = vcombine.low %v238, %v237
    %v449 = vunpack.c.l.s4 1983009808
    %v450 = vunpack.c.0.s8 %v449
    %v451 = vlaneseq
    %v452 = vshrl.u32 %v451, 7
    %v453 = vsub.s32 %v450, %v452
    %v454 = vrot.slane %v446, %v453
    %v456 = vunpack.c.l.s4 1983009808
    %v457 = vunpack.c.0.s8 %v456
    %v458 = vlaneseq
    %v459 = vshrl.u32 %v458, 7
    %v460 = vsub.s32 %v457, %v459
    %v461 = vrot.slane %v447, %v460
    %v462 = vcombine.low %v454, %v461
    %v463 = vcombine.low %v236, %v235
    %v464 = vcombine.low %v234, %v233
    %v466 = vunpack.c.l.s4 1983009808
    %v467 = vunpack.c.0.s8 %v466
    %v468 = vlaneseq
    %v469 = vshrl.u32 %v468, 7
    %v470 = vsub.s32 %v467, %v469
    %v471 = vrot.slane %v463, %v470
    %v473 = vunpack.c.l.s4 1983009808
    %v474 = vunpack.c.0.s8 %v473
    %v475 = vlaneseq
    %v476 = vshrl.u32 %v475, 7
    %v477 = vsub.s32 %v474, %v476
    %v478 = vrot.slane %v464, %v477
    %v479 = vcombine.low %v471, %v478
    %v480 = vcombine.low %v232, %v231
    %v481 = vcombine.low %v230, %v229
    %v483 = vunpack.c.l.s4 1983009808
    %v484 = vunpack.c.0.s8 %v483
    %v485 = vlaneseq
    %v486 = vshrl.u32 %v485, 7
    %v487 = vsub.s32 %v484, %v486
    %v488 = vrot.slane %v480, %v487
    %v490 = vunpack.c.l.s4 1983009808
    %v491 = vunpack.c.0.s8 %v490
    %v492 = vlaneseq
    %v493 = vshrl.u32 %v492, 7
    %v494 = vsub.s32 %v491, %v493
    %v495 = vrot.slane %v481, %v494
    %v496 = vcombine.low %v488, %v495
    %v497 = vcombine.low %v228, %v227
    %v499 = vunpack.c.l.s4 1983009808
    %v500 = vunpack.c.0.s8 %v499
    %v501 = vlaneseq
    %v502 = vshrl.u32 %v501, 7
    %v503 = vsub.s32 %v500, %v502
    %v504 = vrot.slane %v497, %v503
    %v506 = vunpack.c.l.s4 1983009808
    %v507 = vunpack.c.0.s8 %v506
    %v508 = vlaneseq
    %v509 = vshrl.u32 %v508, 7
    %v510 = vsub.s32 %v507, %v509
    %v511 = vrot.slane %v226, %v510
    %v512 = vcombine.low %v504, %v511
    %v518 = vsub.f32 %v50, %v445
    %v519 = vsub.f32 %v51, %v462
    %v520 = vsub.f32 %v52, %v479
    %v521 = vsub.f32 %v53, %v496
    %v522 = vsub.f32 %v54, %v512
    %v523 = vand.u32 2147483647, %v518
    %v524 = vand.u32 2147483647, %v519
    %v525 = vand.u32 2147483647, %v520
    %v526 = vand.u32 2147483647, %v521
    %v527 = vand.u32 2147483647, %v522
    %v547 = vcombine.low %v409, %v408
    %v548 = vcombine.low %v407, %v406
    %v550 = vunpack.c.l.s4 1983009808
    %v551 = vunpack.c.0.s8 %v550
    %v552 = vlaneseq
    %v553 = vshrl.u32 %v552, 7
    %v554 = vsub.s32 %v551, %v553
    %v555 = vrot.slane %v547, %v554
    %v557 = vunpack.c.l.s4 1983009808
    %v558 = vunpack.c.0.s8 %v557
    %v559 = vlaneseq
    %v560 = vshrl.u32 %v559, 7
    %v561 = vsub.s32 %v558, %v560
    %v562 = vrot.slane %v548, %v561
    %v563 = vcombine.low %v555, %v562
    %v564 = vcombine.low %v405, %v404
    %v565 = vcombine.low %v403, %v402
    %v567 = vunpack.c.l.s4 1983009808
    %v568 = vunpack.c.0.s8 %v567
    %v569 = vlaneseq
    %v570 = vshrl.u32 %v569, 7
    %v571 = vsub.s32 %v568, %v570
    %v572 = vrot.slane %v564, %v571
    %v574 = vunpack.c.l.s4 1983009808
    %v575 = vunpack.c.0.s8 %v574
    %v576 = vlaneseq
    %v577 = vshrl.u32 %v576, 7
    %v578 = vsub.s32 %v575, %v577
    %v579 = vrot.slane %v565, %v578
    %v580 = vcombine.low %v572, %v579
    %v581 = vcombine.low %v401, %v400
    %v582 = vcombine.low %v399, %v398
    %v584 = vunpack.c.l.s4 1983009808
    %v585 = vunpack.c.0.s8 %v584
    %v586 = vlaneseq
    %v587 = vshrl.u32 %v586, 7
    %v588 = vsub.s32 %v585, %v587
    %v589 = vrot.slane %v581, %v588
    %v591 = vunpack.c.l.s4 1983009808
    %v592 = vunpack.c.0.s8 %v591
    %v593 = vlaneseq
    %v594 = vshrl.u32 %v593, 7
    %v595 = vsub.s32 %v592, %v594
    %v596 = vrot.slane %v582, %v595
    %v597 = vcombine.low %v589, %v596
    %v598 = vcombine.low %v397, %v396
    %v599 = vcombine.low %v395, %v394
    %v601 = vunpack.c.l.s4 1983009808
    %v602 = vunpack.c.0.s8 %v601
    %v603 = vlaneseq
    %v604 = vshrl.u32 %v603, 7
    %v605 = vsub.s32 %v602, %v604
    %v606 = vrot.slane %v598, %v605
    %v608 = vunpack.c.l.s4 1983009808
    %v609 = vunpack.c.0.s8 %v608
    %v610 = vlaneseq
    %v611 = vshrl.u32 %v610, 7
    %v612 = vsub.s32 %v609, %v611
    %v613 = vrot.slane %v599, %v612
    %v614 = vcombine.low %v606, %v613
    %v615 = vcombine.low %v393, %v392
    %v617 = vunpack.c.l.s4 1983009808
    %v618 = vunpack.c.0.s8 %v617
    %v619 = vlaneseq
    %v620 = vshrl.u32 %v619, 7
    %v621 = vsub.s32 %v618, %v620
    %v622 = vrot.slane %v615, %v621
    %v624 = vunpack.c.l.s4 1983009808
    %v625 = vunpack.c.0.s8 %v624
    %v626 = vlaneseq
    %v627 = vshrl.u32 %v626, 7
    %v628 = vsub.s32 %v625, %v627
    %v629 = vrot.slane %v391, %v628
    %v630 = vcombine.low %v622, %v629
    %v636 = vsub.f32 %v55, %v563
    %v637 = vsub.f32 %v56, %v580
    %v638 = vsub.f32 %v57, %v597
    %v639 = vsub.f32 %v58, %v614
    %v640 = vsub.f32 %v59, %v630
    %v641 = vand.u32 2147483647, %v636
    %v642 = vand.u32 2147483647, %v637
    %v643 = vand.u32 2147483647, %v638
    %v644 = vand.u32 2147483647, %v639
    %v645 = vand.u32 2147483647, %v640
    %v646 = vsub.f32 %v523, %v641
    %v647 = vsub.f32 %v524, %v642
    %v648 = vsub.f32 %v525, %v643
    %v649 = vsub.f32 %v526, %v644
    %v650 = vsub.f32 %v527, %v645
    %v651 = vand.u32 2147483647, %v646
    %v652 = vand.u32 2147483647, %v647
    %v653 = vand.u32 2147483647, %v648
    %v654 = vand.u32 2147483647, %v649
    %v655 = vand.u32 2147483647, %v650
    %v659 = vlaneseq
    %v660 = vshrl.u32 %v659, 7
    %v661 = vsub.s32 0, %v660
    %v662 = vrot.slane %v60, %v661
    %v663 = vlaneseq
    %v664 = vshrl.u32 %v663, 7
    %v665 = vsub.s32 1, %v664
    %v666 = vrot.slane %v60, %v665
    %v667 = vlaneseq
    %v668 = vshrl.u32 %v667, 7
    %v669 = vsub.s32 2, %v668
    %v670 = vrot.slane %v60, %v669
    %v671 = vlaneseq
    %v672 = vshrl.u32 %v671, 7
    %v673 = vsub.s32 3, %v672
    %v674 = vrot.slane %v60, %v673
    %v675 = vlaneseq
    %v676 = vshrl.u32 %v675, 7
    %v677 = vsub.s32 4, %v676
    %v678 = vrot.slane %v60, %v677
    %v679 = vlaneseq
    %v680 = vshrl.u32 %v679, 7
    %v681 = vsub.s32 5, %v680
    %v682 = vrot.slane %v60, %v681
    %v683 = vlaneseq
    %v684 = vshrl.u32 %v683, 7
    %v685 = vsub.s32 6, %v684
    %v686 = vrot.slane %v60, %v685
    %v687 = vlaneseq
    %v688 = vshrl.u32 %v687, 7
    %v689 = vsub.s32 7, %v688
    %v690 = vrot.slane %v60, %v689
    %v691 = vlaneseq
    %v692 = vshrl.u32 %v691, 7
    %v693 = vsub.s32 0, %v692
    %v694 = vrot.slane %v61, %v693
    %v695 = vlaneseq
    %v696 = vshrl.u32 %v695, 7
    %v697 = vsub.s32 1, %v696
    %v698 = vrot.slane %v61, %v697
    %v699 = vlaneseq
    %v700 = vshrl.u32 %v699, 7
    %v701 = vsub.s32 2, %v700
    %v702 = vrot.slane %v61, %v701
    %v703 = vlaneseq
    %v704 = vshrl.u32 %v703, 7
    %v705 = vsub.s32 3, %v704
    %v706 = vrot.slane %v61, %v705
    %v707 = vlaneseq
    %v708 = vshrl.u32 %v707, 7
    %v709 = vsub.s32 4, %v708
    %v710 = vrot.slane %v61, %v709
    %v711 = vlaneseq
    %v712 = vshrl.u32 %v711, 7
    %v713 = vsub.s32 5, %v712
    %v714 = vrot.slane %v61, %v713
    %v715 = vlaneseq
    %v716 = vshrl.u32 %v715, 7
    %v717 = vsub.s32 6, %v716
    %v718 = vrot.slane %v61, %v717
    %v719 = vlaneseq
    %v720 = vshrl.u32 %v719, 7
    %v721 = vsub.s32 7, %v720
    %v722 = vrot.slane %v61, %v721
    %v723 = vlaneseq
    %v724 = vshrl.u32 %v723, 7
    %v725 = vsub.s32 0, %v724
    %v726 = vrot.slane %v62, %v725
    %v727 = vlaneseq
    %v728 = vshrl.u32 %v727, 7
    %v729 = vsub.s32 1, %v728
    %v730 = vrot.slane %v62, %v729
    %v731 = vlaneseq
    %v732 = vshrl.u32 %v731, 7
    %v733 = vsub.s32 2, %v732
    %v734 = vrot.slane %v62, %v733
    %v735 = vcombine.low %v662, %v666
    %v736 = vcombine.low %v670, %v674
    %v738 = vunpack.c.l.s4 1983009808
    %v739 = vunpack.c.0.s8 %v738
    %v740 = vlaneseq
    %v741 = vshrl.u32 %v740, 7
    %v742 = vsub.s32 %v739, %v741
    %v743 = vrot.slane %v735, %v742
    %v745 = vunpack.c.l.s4 1983009808
    %v746 = vunpack.c.0.s8 %v745
    %v747 = vlaneseq
    %v748 = vshrl.u32 %v747, 7
    %v749 = vsub.s32 %v746, %v748
    %v750 = vrot.slane %v736, %v749
    %v751 = vcombine.low %v743, %v750
    %v752 = vcombine.low %v678, %v682
    %v753 = vcombine.low %v686, %v690
    %v755 = vunpack.c.l.s4 1983009808
    %v756 = vunpack.c.0.s8 %v755
    %v757 = vlaneseq
    %v758 = vshrl.u32 %v757, 7
    %v759 = vsub.s32 %v756, %v758
    %v760 = vrot.slane %v752, %v759
    %v762 = vunpack.c.l.s4 1983009808
    %v763 = vunpack.c.0.s8 %v762
    %v764 = vlaneseq
    %v765 = vshrl.u32 %v764, 7
    %v766 = vsub.s32 %v763, %v765
    %v767 = vrot.slane %v753, %v766
    %v768 = vcombine.low %v760, %v767
    %v769 = vcombine.low %v694, %v698
    %v770 = vcombine.low %v702, %v706
    %v772 = vunpack.c.l.s4 1983009808
    %v773 = vunpack.c.0.s8 %v772
    %v774 = vlaneseq
    %v775 = vshrl.u32 %v774, 7
    %v776 = vsub.s32 %v773, %v775
    %v777 = vrot.slane %v769, %v776
    %v779 = vunpack.c.l.s4 1983009808
    %v780 = vunpack.c.0.s8 %v779
    %v781 = vlaneseq
    %v782 = vshrl.u32 %v781, 7
    %v783 = vsub.s32 %v780, %v782
    %v784 = vrot.slane %v770, %v783
    %v785 = vcombine.low %v777, %v784
    %v786 = vcombine.low %v710, %v714
    %v787 = vcombine.low %v718, %v722
    %v789 = vunpack.c.l.s4 1983009808
    %v790 = vunpack.c.0.s8 %v789
    %v791 = vlaneseq
    %v792 = vshrl.u32 %v791, 7
    %v793 = vsub.s32 %v790, %v792
    %v794 = vrot.slane %v786, %v793
    %v796 = vunpack.c.l.s4 1983009808
    %v797 = vunpack.c.0.s8 %v796
    %v798 = vlaneseq
    %v799 = vshrl.u32 %v798, 7
    %v800 = vsub.s32 %v797, %v799
    %v801 = vrot.slane %v787, %v800
    %v802 = vcombine.low %v794, %v801
    %v803 = vcombine.low %v726, %v730
    %v805 = vunpack.c.l.s4 1983009808
    %v806 = vunpack.c.0.s8 %v805
    %v807 = vlaneseq
    %v808 = vshrl.u32 %v807, 7
    %v809 = vsub.s32 %v806, %v808
    %v810 = vrot.slane %v803, %v809
    %v812 = vunpack.c.l.s4 1983009808
    %v813 = vunpack.c.0.s8 %v812
    %v814 = vlaneseq
    %v815 = vshrl.u32 %v814, 7
    %v816 = vsub.s32 %v813, %v815
    %v817 = vrot.slane %v734, %v816
    %v818 = vcombine.low %v810, %v817
    %v824 = vmul.f32 %v651, %v751
    %v825 = vmul.f32 %v652, %v768
    %v826 = vmul.f32 %v653, %v785
    %v827 = vmul.f32 %v654, %v802
    %v828 = vmul.f32 %v655, %v818
    %v829 = vsub.f32 %v50, %v75
    %v830 = vand.u32 2147483647, %v829
    %v831 = vsub.f32 %v55, %v76
    %v832 = vand.u32 2147483647, %v831
    %v833 = vsub.f32 %v830, %v832
    %v834 = vand.u32 2147483647, %v833
    %v835 = vsub.f32 %v50, %v244
    %v836 = vand.u32 2147483647, %v835
    %v837 = vsub.f32 %v55, %v409
    %v838 = vand.u32 2147483647, %v837
    %v839 = vsub.f32 %v836, %v838
    %v840 = vand.u32 2147483647, %v839
    %p841 = scmp.ne.s32.totalorder 0, 0
    // Predicated region
    $region30: #{tpu_custom_call.1} parent=1 // pred_check
      %p842 = pneg %p841
    $region31: #{tpu_custom_call.1} parent=1 // pred_check_branch
      %844 = sbr.rel (%p842) target = $region33
    $region32: #{tpu_custom_call.1} parent=1 // pred_region
      %v845 = vld [vmem:[#allocation2] sm:$0xff]
      %v846 = vld [vmem:[#allocation2 + $0x8] sm:$0xff]
      %v847 = vld [vmem:[#allocation2 + $0x10] sm:$0xff]
      %v848 = vld [vmem:[#allocation2 + $0x18] sm:$0xff]
      %v849 = vld [vmem:[#allocation2 + $0x20] sm:$0x3f]
      %v850 = vadd.f32 %v845, %v824
      %v851 = vadd.f32 %v846, %v825
      %v852 = vadd.f32 %v847, %v826
      %v853 = vadd.f32 %v848, %v827
      %v854 = vadd.f32 %v849, %v828
      %855 = vst [vmem:[#allocation2] sm:$0xff] %v850
      %856 = vst [vmem:[#allocation2 + $0x8] sm:$0xff] %v851
      %857 = vst [vmem:[#allocation2 + $0x10] sm:$0xff] %v852
      %858 = vst [vmem:[#allocation2 + $0x18] sm:$0xff] %v853
      %859 = vst [vmem:[#allocation2 + $0x20] sm:$0x3f] %v854
      %v860 = vld [vmem:[#allocation2] sm:$0x3]
      %v861 = vsub.f32 %v834, %v840
      %v863 = vmul.f32 %v861, %v662
      %v864 = vadd.f32 %v860, %v863
      %vm865 = vcmask 9216
      %866 = vst.msk [vmem:[#allocation2] sm:$0x3] %vm865, %v864
    $region33: #{tpu_custom_call.1} parent=1 // pred_fallthru
      _
    // Predicated region
    $region34: #{tpu_custom_call.1} parent=1 // pred_check
      %p867 = pneg %p63
    $region35: #{tpu_custom_call.1} parent=1 // pred_check_branch
      %869 = sbr.rel (%p867) target = $region37
    $region36: #{tpu_custom_call.1} parent=1 // pred_region
      %v870 = vadd.s32 %v224, 128
      %v871 = vadd.s32 %v224, 256
      %v872 = vadd.s32 %v224, 384
      %v873 = vadd.s32 %v224, 512
      %v874 = vadd.s32 %v224, 640
      %v875 = vadd.s32 %v224, 768
      %v876 = vadd.s32 %v224, 896
      %v877 = vadd.s32 %v224, 1024
      %v878 = vadd.s32 %v224, 1152
      %v879 = vadd.s32 %v224, 1280
      %v880 = vadd.s32 %v224, 1408
      %v881 = vadd.s32 %v224, 1536
      %v882 = vadd.s32 %v224, 1664
      %v883 = vadd.s32 %v224, 1792
      %v884 = vadd.s32 %v224, 1920
      %v885 = vadd.s32 %v224, 2048
      %v886 = vadd.s32 %v224, 2176
      %v887 = vadd.s32 %v224, 2304
      %vm888 = vcmp.ge.s32.totalorder %v224, 2
      %vm889 = vcmp.ge.s32.totalorder %v870, 2
      %vm890 = vcmp.ge.s32.totalorder %v871, 2
      %vm891 = vcmp.ge.s32.totalorder %v872, 2
      %vm892 = vcmp.ge.s32.totalorder %v873, 2
      %vm893 = vcmp.ge.s32.totalorder %v874, 2
      %vm894 = vcmp.ge.s32.totalorder %v875, 2
      %vm895 = vcmp.ge.s32.totalorder %v876, 2
      %vm896 = vcmp.ge.s32.totalorder %v877, 2
      %vm897 = vcmp.ge.s32.totalorder %v878, 2
      %vm898 = vcmp.ge.s32.totalorder %v879, 2
      %vm899 = vcmp.ge.s32.totalorder %v880, 2
      %vm900 = vcmp.ge.s32.totalorder %v881, 2
      %vm901 = vcmp.ge.s32.totalorder %v882, 2
      %vm902 = vcmp.ge.s32.totalorder %v883, 2
      %vm903 = vcmp.ge.s32.totalorder %v884, 2
      %vm904 = vcmp.ge.s32.totalorder %v885, 2
      %vm905 = vcmp.ge.s32.totalorder %v886, 2
      %vm906 = vcmp.ge.s32.totalorder %v887, 2
      %vm907 = vcmp.lt.s32.totalorder %v224, 2400
      %vm908 = vcmp.lt.s32.totalorder %v870, 2400
      %vm909 = vcmp.lt.s32.totalorder %v871, 2400
      %vm910 = vcmp.lt.s32.totalorder %v872, 2400
      %vm911 = vcmp.lt.s32.totalorder %v873, 2400
      %vm912 = vcmp.lt.s32.totalorder %v874, 2400
      %vm913 = vcmp.lt.s32.totalorder %v875, 2400
      %vm914 = vcmp.lt.s32.totalorder %v876, 2400
      %vm915 = vcmp.lt.s32.totalorder %v877, 2400
      %vm916 = vcmp.lt.s32.totalorder %v878, 2400
      %vm917 = vcmp.lt.s32.totalorder %v879, 2400
      %vm918 = vcmp.lt.s32.totalorder %v880, 2400
      %vm919 = vcmp.lt.s32.totalorder %v881, 2400
      %vm920 = vcmp.lt.s32.totalorder %v882, 2400
      %vm921 = vcmp.lt.s32.totalorder %v883, 2400
      %vm922 = vcmp.lt.s32.totalorder %v884, 2400
      %vm923 = vcmp.lt.s32.totalorder %v885, 2400
      %vm924 = vcmp.lt.s32.totalorder %v886, 2400
      %vm925 = vcmp.lt.s32.totalorder %v887, 2400
      %vm926 = vmand %vm888, %vm907
      %vm927 = vmand %vm889, %vm908
      %vm928 = vmand %vm890, %vm909
      %vm929 = vmand %vm891, %vm910
      %vm930 = vmand %vm892, %vm911
      %vm931 = vmand %vm893, %vm912
      %vm932 = vmand %vm894, %vm913
      %vm933 = vmand %vm895, %vm914
      %vm934 = vmand %vm896, %vm915
      %vm935 = vmand %vm897, %vm916
      %vm936 = vmand %vm898, %vm917
      %vm937 = vmand %vm899, %vm918
      %vm938 = vmand %vm900, %vm919
      %vm939 = vmand %vm901, %vm920
      %vm940 = vmand %vm902, %vm921
      %vm941 = vmand %vm903, %vm922
      %vm942 = vmand %vm904, %vm923
      %vm943 = vmand %vm905, %vm924
      %vm944 = vmand %vm906, %vm925
      %v945 = vld [vmem:[#allocation2] sm:$0xff]
      %v946 = vld [vmem:[#allocation2 + $0x8] sm:$0xff]
      %v947 = vld [vmem:[#allocation2 + $0x10] sm:$0xff]
      %v948 = vld [vmem:[#allocation2 + $0x18] sm:$0xff]
      %v949 = vld [vmem:[#allocation2 + $0x20] sm:$0x3f]
      %v950 = vsel %vm926, 1, 0
      %v951 = vsel %vm927, 1, 0
      %v952 = vsel %vm928, 1, 0
      %v953 = vsel %vm929, 1, 0
      %v954 = vsel %vm930, 1, 0
      %v955 = vsel %vm931, 1, 0
      %v956 = vsel %vm932, 1, 0
      %v957 = vsel %vm933, 1, 0
      %v958 = vsel %vm934, 1, 0
      %v959 = vsel %vm935, 1, 0
      %v960 = vsel %vm936, 1, 0
      %v961 = vsel %vm937, 1, 0
      %v962 = vsel %vm938, 1, 0
      %v963 = vsel %vm939, 1, 0
      %v964 = vsel %vm940, 1, 0
      %v965 = vsel %vm941, 1, 0
      %v966 = vsel %vm942, 1, 0
      %v967 = vsel %vm943, 1, 0
      %v968 = vsel %vm944, 1, 0
      %vm969 = vcmp.eq.s32.totalorder %v950, 1
      %vm970 = vcmp.eq.s32.totalorder %v951, 1
      %vm971 = vcmp.eq.s32.totalorder %v952, 1
      %vm972 = vcmp.eq.s32.totalorder %v953, 1
      %vm973 = vcmp.eq.s32.totalorder %v954, 1
      %vm974 = vcmp.eq.s32.totalorder %v955, 1
      %vm975 = vcmp.eq.s32.totalorder %v956, 1
      %vm976 = vcmp.eq.s32.totalorder %v957, 1
      %vm977 = vcmp.eq.s32.totalorder %v958, 1
      %vm978 = vcmp.eq.s32.totalorder %v959, 1
      %vm979 = vcmp.eq.s32.totalorder %v960, 1
      %vm980 = vcmp.eq.s32.totalorder %v961, 1
      %vm981 = vcmp.eq.s32.totalorder %v962, 1
      %vm982 = vcmp.eq.s32.totalorder %v963, 1
      %vm983 = vcmp.eq.s32.totalorder %v964, 1
      %vm984 = vcmp.eq.s32.totalorder %v965, 1
      %vm985 = vcmp.eq.s32.totalorder %v966, 1
      %vm986 = vcmp.eq.s32.totalorder %v967, 1
      %vm987 = vcmp.eq.s32.totalorder %v968, 1
      %v993 = vcombine.high %v824, %v824
      %v995 = vunpack.c.l.s4 1983009808
      %v996 = vunpack.c.0.s8 %v995
      %v997 = vlaneseq
      %v998 = vshrl.u32 %v997, 7
      %v999 = vsub.s32 %v996, %v998
      %v1000 = vrot.slane %v824, %v999
      %v1002 = vunpack.c.l.s4 1983009808
      %v1003 = vunpack.c.0.s8 %v1002
      %v1004 = vlaneseq
      %v1005 = vshrl.u32 %v1004, 7
      %v1006 = vsub.s32 %v1003, %v1005
      %v1007 = vrot.slane %v993, %v1006
      %v1008 = vcombine.high %v1000, %v1000
      %v1009 = vcombine.high %v1007, %v1007
      %v1010 = vcombine.high %v825, %v825
      %v1012 = vunpack.c.l.s4 1983009808
      %v1013 = vunpack.c.0.s8 %v1012
      %v1014 = vlaneseq
      %v1015 = vshrl.u32 %v1014, 7
      %v1016 = vsub.s32 %v1013, %v1015
      %v1017 = vrot.slane %v825, %v1016
      %v1019 = vunpack.c.l.s4 1983009808
      %v1020 = vunpack.c.0.s8 %v1019
      %v1021 = vlaneseq
      %v1022 = vshrl.u32 %v1021, 7
      %v1023 = vsub.s32 %v1020, %v1022
      %v1024 = vrot.slane %v1010, %v1023
      %v1025 = vcombine.high %v1017, %v1017
      %v1026 = vcombine.high %v1024, %v1024
      %v1027 = vcombine.high %v826, %v826
      %v1029 = vunpack.c.l.s4 1983009808
      %v1030 = vunpack.c.0.s8 %v1029
      %v1031 = vlaneseq
      %v1032 = vshrl.u32 %v1031, 7
      %v1033 = vsub.s32 %v1030, %v1032
      %v1034 = vrot.slane %v826, %v1033
      %v1036 = vunpack.c.l.s4 1983009808
      %v1037 = vunpack.c.0.s8 %v1036
      %v1038 = vlaneseq
      %v1039 = vshrl.u32 %v1038, 7
      %v1040 = vsub.s32 %v1037, %v1039
      %v1041 = vrot.slane %v1027, %v1040
      %v1042 = vcombine.high %v1034, %v1034
      %v1043 = vcombine.high %v1041, %v1041
      %v1044 = vcombine.high %v827, %v827
      %v1046 = vunpack.c.l.s4 1983009808
      %v1047 = vunpack.c.0.s8 %v1046
      %v1048 = vlaneseq
      %v1049 = vshrl.u32 %v1048, 7
      %v1050 = vsub.s32 %v1047, %v1049
      %v1051 = vrot.slane %v827, %v1050
      %v1053 = vunpack.c.l.s4 1983009808
      %v1054 = vunpack.c.0.s8 %v1053
      %v1055 = vlaneseq
      %v1056 = vshrl.u32 %v1055, 7
      %v1057 = vsub.s32 %v1054, %v1056
      %v1058 = vrot.slane %v1044, %v1057
      %v1059 = vcombine.high %v1051, %v1051
      %v1060 = vcombine.high %v1058, %v1058
      %v1061 = vcombine.high %v828, %v828
      %v1063 = vunpack.c.l.s4 1983009808
      %v1064 = vunpack.c.0.s8 %v1063
      %v1065 = vlaneseq
      %v1066 = vshrl.u32 %v1065, 7
      %v1067 = vsub.s32 %v1064, %v1066
      %v1068 = vrot.slane %v828, %v1067
      %v1070 = vunpack.c.l.s4 1983009808
      %v1071 = vunpack.c.0.s8 %v1070
      %v1072 = vlaneseq
      %v1073 = vshrl.u32 %v1072, 7
      %v1074 = vsub.s32 %v1071, %v1073
      %v1075 = vrot.slane %v1061, %v1074
      %v1076 = vcombine.high %v1068, %v1068
      %v1096 = vsel %vm969, %v1000, 0.0
      %v1097 = vsel %vm970, %v1008, 0.0
      %v1098 = vsel %vm971, %v1007, 0.0
      %v1099 = vsel %vm972, %v1009, 0.0
      %v1100 = vsel %vm973, %v1017, 0.0
      %v1101 = vsel %vm974, %v1025, 0.0
      %v1102 = vsel %vm975, %v1024, 0.0
      %v1103 = vsel %vm976, %v1026, 0.0
      %v1104 = vsel %vm977, %v1034, 0.0
      %v1105 = vsel %vm978, %v1042, 0.0
      %v1106 = vsel %vm979, %v1041, 0.0
      %v1107 = vsel %vm980, %v1043, 0.0
      %v1108 = vsel %vm981, %v1051, 0.0
      %v1109 = vsel %vm982, %v1059, 0.0
      %v1110 = vsel %vm983, %v1058, 0.0
      %v1111 = vsel %vm984, %v1060, 0.0
      %v1112 = vsel %vm985, %v1068, 0.0
      %v1113 = vsel %vm986, %v1076, 0.0
      %v1114 = vsel %vm987, %v1075, 0.0
      %v1134 = vcombine.low %v1096, %v1097
      %v1135 = vcombine.low %v1098, %v1099
      %v1137 = vunpack.c.l.s4 1983009808
      %v1138 = vunpack.c.0.s8 %v1137
      %v1139 = vlaneseq
      %v1140 = vshrl.u32 %v1139, 7
      %v1141 = vsub.s32 %v1138, %v1140
      %v1142 = vrot.slane %v1134, %v1141
      %v1144 = vunpack.c.l.s4 1983009808
      %v1145 = vunpack.c.0.s8 %v1144
      %v1146 = vlaneseq
      %v1147 = vshrl.u32 %v1146, 7
      %v1148 = vsub.s32 %v1145, %v1147
      %v1149 = vrot.slane %v1135, %v1148
      %v1150 = vcombine.low %v1142, %v1149
      %v1151 = vcombine.low %v1100, %v1101
      %v1152 = vcombine.low %v1102, %v1103
      %v1154 = vunpack.c.l.s4 1983009808
      %v1155 = vunpack.c.0.s8 %v1154
      %v1156 = vlaneseq
      %v1157 = vshrl.u32 %v1156, 7
      %v1158 = vsub.s32 %v1155, %v1157
      %v1159 = vrot.slane %v1151, %v1158
      %v1161 = vunpack.c.l.s4 1983009808
      %v1162 = vunpack.c.0.s8 %v1161
      %v1163 = vlaneseq
      %v1164 = vshrl.u32 %v1163, 7
      %v1165 = vsub.s32 %v1162, %v1164
      %v1166 = vrot.slane %v1152, %v1165
      %v1167 = vcombine.low %v1159, %v1166
      %v1168 = vcombine.low %v1104, %v1105
      %v1169 = vcombine.low %v1106, %v1107
      %v1171 = vunpack.c.l.s4 1983009808
      %v1172 = vunpack.c.0.s8 %v1171
      %v1173 = vlaneseq
      %v1174 = vshrl.u32 %v1173, 7
      %v1175 = vsub.s32 %v1172, %v1174
      %v1176 = vrot.slane %v1168, %v1175
      %v1178 = vunpack.c.l.s4 1983009808
      %v1179 = vunpack.c.0.s8 %v1178
      %v1180 = vlaneseq
      %v1181 = vshrl.u32 %v1180, 7
      %v1182 = vsub.s32 %v1179, %v1181
      %v1183 = vrot.slane %v1169, %v1182
      %v1184 = vcombine.low %v1176, %v1183
      %v1185 = vcombine.low %v1108, %v1109
      %v1186 = vcombine.low %v1110, %v1111
      %v1188 = vunpack.c.l.s4 1983009808
      %v1189 = vunpack.c.0.s8 %v1188
      %v1190 = vlaneseq
      %v1191 = vshrl.u32 %v1190, 7
      %v1192 = vsub.s32 %v1189, %v1191
      %v1193 = vrot.slane %v1185, %v1192
      %v1195 = vunpack.c.l.s4 1983009808
      %v1196 = vunpack.c.0.s8 %v1195
      %v1197 = vlaneseq
      %v1198 = vshrl.u32 %v1197, 7
      %v1199 = vsub.s32 %v1196, %v1198
      %v1200 = vrot.slane %v1186, %v1199
      %v1201 = vcombine.low %v1193, %v1200
      %v1202 = vcombine.low %v1112, %v1113
      %v1204 = vunpack.c.l.s4 1983009808
      %v1205 = vunpack.c.0.s8 %v1204
      %v1206 = vlaneseq
      %v1207 = vshrl.u32 %v1206, 7
      %v1208 = vsub.s32 %v1205, %v1207
      %v1209 = vrot.slane %v1202, %v1208
      %v1211 = vunpack.c.l.s4 1983009808
      %v1212 = vunpack.c.0.s8 %v1211
      %v1213 = vlaneseq
      %v1214 = vshrl.u32 %v1213, 7
      %v1215 = vsub.s32 %v1212, %v1214
      %v1216 = vrot.slane %v1114, %v1215
      %v1217 = vcombine.low %v1209, %v1216
      %v1223 = vadd.f32 %v945, %v1150
      %v1224 = vadd.f32 %v946, %v1167
      %v1225 = vadd.f32 %v947, %v1184
      %v1226 = vadd.f32 %v948, %v1201
      %v1227 = vadd.f32 %v949, %v1217
      %1228 = vst [vmem:[#allocation2] sm:$0xff] %v1223
      %1229 = vst [vmem:[#allocation2 + $0x8] sm:$0xff] %v1224
      %1230 = vst [vmem:[#allocation2 + $0x10] sm:$0xff] %v1225
      %1231 = vst [vmem:[#allocation2 + $0x18] sm:$0xff] %v1226
      %1232 = vst [vmem:[#allocation2 + $0x20] sm:$0x3f] %v1227
      %v1233 = vld [vmem:[#allocation2] sm:$0x3]
      %v1235 = vmul.f32 %v834, %v662
      %v1236 = vadd.f32 %v1233, %v1235
      %vm1237 = vcmask 9216
      %1238 = vst.msk [vmem:[#allocation2] sm:$0x3] %vm1237, %v1236
      %v1239 = vld [vmem:[#allocation2] sm:$0xff]
      %v1240 = vld [vmem:[#allocation2 + $0x8] sm:$0xff]
      %v1241 = vld [vmem:[#allocation2 + $0x10] sm:$0xff]
      %v1242 = vld [vmem:[#allocation2 + $0x18] sm:$0xff]
      %v1243 = vld [vmem:[#allocation2 + $0x20] sm:$0x3f]
      %v1249 = vcombine.high %v1239, %v1239
      %v1251 = vunpack.c.l.s4 1983009808
      %v1252 = vunpack.c.0.s8 %v1251
      %v1253 = vlaneseq
      %v1254 = vshrl.u32 %v1253, 7
      %v1255 = vsub.s32 %v1252, %v1254
      %v1256 = vrot.slane %v1239, %v1255
      %v1258 = vunpack.c.l.s4 1983009808
      %v1259 = vunpack.c.0.s8 %v1258
      %v1260 = vlaneseq
      %v1261 = vshrl.u32 %v1260, 7
      %v1262 = vsub.s32 %v1259, %v1261
      %v1263 = vrot.slane %v1249, %v1262
      %v1264 = vcombine.high %v1256, %v1256
      %v1265 = vcombine.high %v1263, %v1263
      %v1266 = vcombine.high %v1240, %v1240
      %v1268 = vunpack.c.l.s4 1983009808
      %v1269 = vunpack.c.0.s8 %v1268
      %v1270 = vlaneseq
      %v1271 = vshrl.u32 %v1270, 7
      %v1272 = vsub.s32 %v1269, %v1271
      %v1273 = vrot.slane %v1240, %v1272
      %v1275 = vunpack.c.l.s4 1983009808
      %v1276 = vunpack.c.0.s8 %v1275
      %v1277 = vlaneseq
      %v1278 = vshrl.u32 %v1277, 7
      %v1279 = vsub.s32 %v1276, %v1278
      %v1280 = vrot.slane %v1266, %v1279
      %v1281 = vcombine.high %v1273, %v1273
      %v1282 = vcombine.high %v1280, %v1280
      %v1283 = vcombine.high %v1241, %v1241
      %v1285 = vunpack.c.l.s4 1983009808
      %v1286 = vunpack.c.0.s8 %v1285
      %v1287 = vlaneseq
      %v1288 = vshrl.u32 %v1287, 7
      %v1289 = vsub.s32 %v1286, %v1288
      %v1290 = vrot.slane %v1241, %v1289
      %v1292 = vunpack.c.l.s4 1983009808
      %v1293 = vunpack.c.0.s8 %v1292
      %v1294 = vlaneseq
      %v1295 = vshrl.u32 %v1294, 7
      %v1296 = vsub.s32 %v1293, %v1295
      %v1297 = vrot.slane %v1283, %v1296
      %v1298 = vcombine.high %v1290, %v1290
      %v1299 = vcombine.high %v1297, %v1297
      %v1300 = vcombine.high %v1242, %v1242
      %v1302 = vunpack.c.l.s4 1983009808
      %v1303 = vunpack.c.0.s8 %v1302
      %v1304 = vlaneseq
      %v1305 = vshrl.u32 %v1304, 7
      %v1306 = vsub.s32 %v1303, %v1305
      %v1307 = vrot.slane %v1242, %v1306
      %v1309 = vunpack.c.l.s4 1983009808
      %v1310 = vunpack.c.0.s8 %v1309
      %v1311 = vlaneseq
      %v1312 = vshrl.u32 %v1311, 7
      %v1313 = vsub.s32 %v1310, %v1312
      %v1314 = vrot.slane %v1300, %v1313
      %v1315 = vcombine.high %v1307, %v1307
      %v1316 = vcombine.high %v1314, %v1314
      %v1317 = vcombine.high %v1243, %v1243
      %v1319 = vunpack.c.l.s4 1983009808
      %v1320 = vunpack.c.0.s8 %v1319
      %v1321 = vlaneseq
      %v1322 = vshrl.u32 %v1321, 7
      %v1323 = vsub.s32 %v1320, %v1322
      %v1324 = vrot.slane %v1243, %v1323
      %v1326 = vunpack.c.l.s4 1983009808
      %v1327 = vunpack.c.0.s8 %v1326
      %v1328 = vlaneseq
      %v1329 = vshrl.u32 %v1328, 7
      %v1330 = vsub.s32 %v1327, %v1329
      %v1331 = vrot.slane %v1317, %v1330
      %v1332 = vcombine.high %v1324, %v1324
      %vm1352 = vcmask 1041408
      %v1353 = vsel %vm1352, %v1256, 0.0
      %v1354 = vsel %vm1352, %v1264, 0.0
      %v1355 = vadd.f32 %v1353, %v1354
      %v1356 = vsel %vm1352, %v1263, 0.0
      %v1357 = vadd.f32 %v1355, %v1356
      %v1358 = vsel %vm1352, %v1265, 0.0
      %v1359 = vadd.f32 %v1357, %v1358
      %v1360 = vsel %vm1352, %v1273, 0.0
      %v1361 = vadd.f32 %v1359, %v1360
      %v1362 = vsel %vm1352, %v1281, 0.0
      %v1363 = vadd.f32 %v1361, %v1362
      %v1364 = vsel %vm1352, %v1280, 0.0
      %v1365 = vadd.f32 %v1363, %v1364
      %v1366 = vsel %vm1352, %v1282, 0.0
      %v1367 = vadd.f32 %v1365, %v1366
      %v1368 = vsel %vm1352, %v1290, 0.0
      %v1369 = vadd.f32 %v1367, %v1368
      %v1370 = vsel %vm1352, %v1298, 0.0
      %v1371 = vadd.f32 %v1369, %v1370
      %v1372 = vsel %vm1352, %v1297, 0.0
      %v1373 = vadd.f32 %v1371, %v1372
      %v1374 = vsel %vm1352, %v1299, 0.0
      %v1375 = vadd.f32 %v1373, %v1374
      %v1376 = vsel %vm1352, %v1307, 0.0
      %v1377 = vadd.f32 %v1375, %v1376
      %v1378 = vsel %vm1352, %v1315, 0.0
      %v1379 = vadd.f32 %v1377, %v1378
      %v1380 = vsel %vm1352, %v1314, 0.0
      %v1381 = vadd.f32 %v1379, %v1380
      %v1382 = vsel %vm1352, %v1316, 0.0
      %v1383 = vadd.f32 %v1381, %v1382
      %v1384 = vsel %vm1352, %v1324, 0.0
      %v1385 = vadd.f32 %v1383, %v1384
      %v1386 = vsel %vm1352, %v1332, 0.0
      %v1387 = vadd.f32 %v1385, %v1386
      %v1388 = vsel %vm1352, %v1331, 0.0
      %v1389 = vadd.f32 %v1387, %v1388
      %1390 = vadd.xlane.f32.xlu0 %v1389
      %v1391 = vpop.xlane.xlu0 %1390
      %v1392 = vrot.slane %v1391, 4
      %v1393 = vadd.f32 %v1391, %v1392
      %v1394 = vrot.slane %v1393, 2
      %v1395 = vadd.f32 %v1393, %v1394
      %v1396 = vrot.slane %v1395, 1
      %v1397 = vadd.f32 %v1395, %v1396
      %s1398 = vtos %v1397
      %v1399 = vstv %s1398
      %1400 = vst [vmem:[#allocation11] sm:$0x1] %v1399
    $region37: #{tpu_custom_call.1} parent=1 // pred_fallthru
      _
    %vm1401 = vcmask 9216
    %1402 = vst.msk [vmem:[#allocation3] sm:$0x3] %vm1401, %v244
    %1403 = vst.msk [vmem:[#allocation4] sm:$0x3] %vm1401, %v409
    // Predicated region
    $region38: #{tpu_custom_call.1} parent=1 // pred_check
      _
    $region39: #{tpu_custom_call.1} parent=1 // pred_check_branch
      %1405 = sbr.rel (0) target = $region41
    $region40: #{tpu_custom_call.1} parent=1 // pred_region
      %s1407 = ssub.s32 16, 16
      %1408 = vsyncadd [#allocation7], %s1407
      %s1410 = sshll.u32 [#allocation11], 4
      %s1411 = int_to_ptr.vmem [resolvable:$true] %s1410
      %1413 = dma.vmem_to_hbm [thread:$0]  %s1411, 16, %s3, [#allocation7]
    $region41: #{tpu_custom_call.1} parent=1 // pred_fallthru
      _
    // Predicated region
    $region42: #{tpu_custom_call.1} parent=1 // pred_check
      _
    $region43: #{tpu_custom_call.1} parent=1 // pred_check_branch
      %1415 = sbr.rel (0) target = $region45
    $region44: #{tpu_custom_call.1} parent=1 // pred_region
      %1416 = dma.done [#allocation7], 16
    $region45: #{tpu_custom_call.1} parent=1 // pred_fallthru
      _
    %1417 = vsyncpa [#allocation6], 1
    %1418 = vsyncpa [#allocation9], 1
    %1419 = vsyncpa [#allocation7], 1

</llo_original>
